<compile_context>
chip_gen: v5e
topology: v5e:2x2
jax: 0.10.0
libtpu: 0.0.40
codegen_flags: <defaults>
</compile_context>

<pallas_src>
import functools

import jax
import jax.numpy as jnp
from jax.experimental import pallas as pl
from jax.experimental.pallas import tpu as pltpu


def _round_up(x, m):
    return (x + m - 1) // m * m


def qrdqn_mlp_kernel(x_ref, w1_ref, b1_ref, w2_ref, b2_ref, w3_ref, b3_ref, o_ref):
    """Fused 3-layer MLP for one batch tile: (Linear+ReLU) x2 then Linear.

    Everything is f32; accumulation is forced to f32 via preferred_element_type.
    Weights/biases are VMEM-resident across all grid steps (constant index_map).
    """
    x = x_ref[...]                                                     # [TB, S] f32

    h1 = jnp.dot(x, w1_ref[...], preferred_element_type=jnp.float32) + b1_ref[...]
    h1 = jnp.maximum(h1, 0.0)

    h2 = jnp.dot(h1, w2_ref[...], preferred_element_type=jnp.float32) + b2_ref[...]
    h2 = jnp.maximum(h2, 0.0)

    out = jnp.dot(h2, w3_ref[...], preferred_element_type=jnp.float32) + b3_ref[...]
    o_ref[...] = out.astype(o_ref.dtype)


def qrdqn_forward(state, params, *, action_size, quantile_resolution, block_b=1024):
    """Pallas-backed forward pass of QrdqnNetwork.

    state: [B, state_size] float32
    returns: [B, action_size, quantile_resolution] float32
    """
    w1, b1, w2, b2, w3, b3 = params
    B, S = state.shape
    H1 = w1.shape[1]
    H2 = w2.shape[1]
    out_size = action_size * quantile_resolution
    assert w3.shape[1] == out_size

    # --- batch tiling ---------------------------------------------------------
    # tile must be a multiple of 8 sublanes; cap it so the grid keeps >=2 steps
    # when the batch allows it (feeds both v7x TensorCores; harmless on v5e/v6e).
    tb = min(block_b, _round_up(B, 8))
    half = _round_up(pl.cdiv(B, 2), 8)
    if B > 8 and tb > half:
        tb = half
    b_pad = _round_up(B, tb)

    x = state.astype(jnp.float32)
    if b_pad != B:
        x = jnp.zeros((b_pad, S), jnp.float32).at[:B].set(x)

    w1f = w1.astype(jnp.float32)
    w2f = w2.astype(jnp.float32)
    w3f = w3.astype(jnp.float32)
    b1f = b1.astype(jnp.float32)
    b2f = b2.astype(jnp.float32)
    b3f = b3.astype(jnp.float32)

    grid = (b_pad // tb,)

    x_spec = pl.BlockSpec((tb, S), lambda i: (i, 0))
    # Unpadded output block: last dim == full array dim, so no 128 requirement,
    # and the HBM side stays fully contiguous.
    o_spec = pl.BlockSpec((tb, out_size), lambda i: (i, 0))

    def resident(arr):
        # Whole-array block with a constant index_map: DMA'd once, stays in VMEM
        # across all batch-tile grid steps.
        return pl.BlockSpec(arr.shape, lambda i: (0, 0))

    flops = 2 * b_pad * (S * H1 + H1 * H2 + H2 * out_size)
    bytes_accessed = (
        x.size * 4
        + sum(a.size * 4 for a in (w1f, b1f, w2f, b2f, w3f, b3f))
        + b_pad * out_size * 4
    )
    cost = pl.CostEstimate(flops=flops, transcendentals=0,
                           bytes_accessed=bytes_accessed)

    flat = pl.pallas_call(
        qrdqn_mlp_kernel,
        out_shape=jax.ShapeDtypeStruct((b_pad, out_size), jnp.float32),
        grid=grid,
        in_specs=[x_spec,
                  resident(w1f), resident(b1f),
                  resident(w2f), resident(b2f),
                  resident(w3f), resident(b3f)],
        out_specs=o_spec,
        compiler_params=pltpu.CompilerParams(
            dimension_semantics=("parallel",),
            vmem_limit_bytes=32 * 1024 * 1024),
        cost_estimate=cost,
    )(x, w1f, b1f, w2f, b2f, w3f, b3f)

    # strip batch padding (only when B wasn't a tile multiple), then torch-style view
    out = flat if b_pad == B else flat[:B]
    return out.reshape(-1, action_size, quantile_resolution)


def init_params(key, state_size, hidden_dims, out_size):
    """Deterministic synthetic parameter init (Glorot-ish scaling), f32 master copies."""
    dims = [state_size] + list(hidden_dims) + [out_size]
    params = []
    keys = jax.random.split(key, len(dims) - 1)
    for k, (fan_in, fan_out) in zip(keys, zip(dims[:-1], dims[1:])):
        scale = 1.0 / jnp.sqrt(jnp.float32(fan_in))
        w = jax.random.uniform(k, (fan_in, fan_out), jnp.float32, -scale, scale)
        b = jnp.zeros((1, fan_out), jnp.float32)  # 2-D bias row for clean VMEM layout
        params.extend([w, b])
    return tuple(params)


def reference_forward_f32(state, params, *, action_size, quantile_resolution):
    """Pure-JAX f32 reference (matches the original torch module's math)."""
    w1, b1, w2, b2, w3, b3 = params
    h = jnp.maximum(state @ w1 + b1, 0.0)
    h = jnp.maximum(h @ w2 + b2, 0.0)
    o = h @ w3 + b3
    return o.reshape(-1, action_size, quantile_resolution)


if __name__ == "__main__":
    # Small, module-consistent shapes.
    state_size = 32
    hidden_dims = (32, 32)          # model_config.hidden_dims
    action_size = 4
    quantile_resolution = 8         # config.agent.quantile_resolution
    out_size = action_size * quantile_resolution

    key = jax.random.PRNGKey(0)
    k_x, k_p, k_x2 = jax.random.split(key, 3)
    params = init_params(k_p, state_size, hidden_dims, out_size)

    fwd = jax.jit(functools.partial(
        qrdqn_forward,
        action_size=action_size,
        quantile_resolution=quantile_resolution,
    ))

    ok = True

    # Case 1: tiny batch (single grid step, padded to 8 sublanes).
    batch = 2
    state = jax.random.normal(k_x, (batch, state_size), jnp.float32)
    v = jax.block_until_ready(fwd(state, params))
    v_ref = reference_forward_f32(state, params,
                                  action_size=action_size,
                                  quantile_resolution=quantile_resolution)
    ok &= v.shape == (batch, action_size, quantile_resolution)
    ok &= bool(jnp.allclose(v, v_ref, atol=2e-2, rtol=2e-2))

    # Case 2: multi-tile batch (exercises grid >= 2 steps, resident weights,
    # batch padding and the megacore tile cap).
    batch2 = 260
    state2 = jax.random.normal(k_x2, (batch2, state_size), jnp.float32)
    v2 = jax.block_until_ready(fwd(state2, params))
    v2_ref = reference_forward_f32(state2, params,
                                   action_size=action_size,
                                   quantile_resolution=quantile_resolution)
    ok &= v2.shape == (batch2, action_size, quantile_resolution)
    ok &= bool(jnp.allclose(v2, v2_ref, atol=2e-2, rtol=2e-2))

    # TODO(synk): the torch module's nn_trace side-channel (host-side numpy dump) has no
    # Pallas equivalent and is intentionally omitted.
    assert ok
    print("KERNEL_OK")
</pallas_src>

<mosaic_0001>
module attributes {stable_mosaic.version = 11 : i64} {
  func.func @qrdqn_mlp_kernel(%arg0: i32, %arg1: memref<8x32xf32, #tpu.memory_space<vmem>>, %arg2: memref<32x32xf32, #tpu.memory_space<vmem>>, %arg3: memref<1x32xf32, #tpu.memory_space<vmem>>, %arg4: memref<32x32xf32, #tpu.memory_space<vmem>>, %arg5: memref<1x32xf32, #tpu.memory_space<vmem>>, %arg6: memref<32x32xf32, #tpu.memory_space<vmem>>, %arg7: memref<1x32xf32, #tpu.memory_space<vmem>>, %arg8: memref<8x32xf32, #tpu.memory_space<vmem>>) attributes {dimension_semantics = [#tpu.dimension_semantics<parallel>], iteration_bounds = array<i64: 1>, scalar_prefetch = 0 : i64, scratch_operands = 0 : i64, tpu.core_type = #tpu.core_type<tc>, window_params = [{transform_indices = @transform_0, window_bounds = array<i64: 8, 32>}, {pipeline_mode = #tpu.pipeline_mode<synchronous>, transform_indices = @transform_1, window_bounds = array<i64: 32, 32>}, {pipeline_mode = #tpu.pipeline_mode<synchronous>, transform_indices = @transform_2, window_bounds = array<i64: 1, 32>}, {pipeline_mode = #tpu.pipeline_mode<synchronous>, transform_indices = @transform_3, window_bounds = array<i64: 32, 32>}, {pipeline_mode = #tpu.pipeline_mode<synchronous>, transform_indices = @transform_4, window_bounds = array<i64: 1, 32>}, {pipeline_mode = #tpu.pipeline_mode<synchronous>, transform_indices = @transform_5, window_bounds = array<i64: 32, 32>}, {pipeline_mode = #tpu.pipeline_mode<synchronous>, transform_indices = @transform_6, window_bounds = array<i64: 1, 32>}, {transform_indices = @transform_7, window_bounds = array<i64: 8, 32>}]} {
    %c0 = arith.constant 0 : index
    %c0_0 = arith.constant 0 : index
    %0 = vector.load %arg1[%c0, %c0_0] : memref<8x32xf32, #tpu.memory_space<vmem>>, vector<8x32xf32>
    %c0_1 = arith.constant 0 : index
    %c0_2 = arith.constant 0 : index
    %1 = vector.load %arg2[%c0_1, %c0_2] : memref<32x32xf32, #tpu.memory_space<vmem>>, vector<32x32xf32>
    %cst = arith.constant dense<0.000000e+00> : vector<8x32xf32>
    %2 = tpu.matmul %0, %1, %cst {dimension_numbers = #tpu.dot_dimension_numbers<[1], [0], [0], [1], [0, 0, 1, 1], [], []>} : vector<8x32xf32>, vector<32x32xf32>, vector<8x32xf32> -> vector<8x32xf32>
    %c0_3 = arith.constant 0 : index
    %c0_4 = arith.constant 0 : index
    %3 = vector.load %arg3[%c0_3, %c0_4] : memref<1x32xf32, #tpu.memory_space<vmem>>, vector<1x32xf32>
    %4 = vector.broadcast %3 : vector<1x32xf32> to vector<8x32xf32>
    %5 = arith.addf %2, %4 : vector<8x32xf32>
    %cst_5 = arith.constant 0.000000e+00 : f32
    %6 = vector.broadcast %cst_5 : f32 to vector<8x32xf32>
    %7 = arith.maximumf %5, %6 : vector<8x32xf32>
    %c0_6 = arith.constant 0 : index
    %c0_7 = arith.constant 0 : index
    %8 = vector.load %arg4[%c0_6, %c0_7] : memref<32x32xf32, #tpu.memory_space<vmem>>, vector<32x32xf32>
    %cst_8 = arith.constant dense<0.000000e+00> : vector<8x32xf32>
    %9 = tpu.matmul %7, %8, %cst_8 {dimension_numbers = #tpu.dot_dimension_numbers<[1], [0], [0], [1], [0, 0, 1, 1], [], []>} : vector<8x32xf32>, vector<32x32xf32>, vector<8x32xf32> -> vector<8x32xf32>
    %c0_9 = arith.constant 0 : index
    %c0_10 = arith.constant 0 : index
    %10 = vector.load %arg5[%c0_9, %c0_10] : memref<1x32xf32, #tpu.memory_space<vmem>>, vector<1x32xf32>
    %11 = vector.broadcast %10 : vector<1x32xf32> to vector<8x32xf32>
    %12 = arith.addf %9, %11 : vector<8x32xf32>
    %cst_11 = arith.constant 0.000000e+00 : f32
    %13 = vector.broadcast %cst_11 : f32 to vector<8x32xf32>
    %14 = arith.maximumf %12, %13 : vector<8x32xf32>
    %c0_12 = arith.constant 0 : index
    %c0_13 = arith.constant 0 : index
    %15 = vector.load %arg6[%c0_12, %c0_13] : memref<32x32xf32, #tpu.memory_space<vmem>>, vector<32x32xf32>
    %cst_14 = arith.constant dense<0.000000e+00> : vector<8x32xf32>
    %16 = tpu.matmul %14, %15, %cst_14 {dimension_numbers = #tpu.dot_dimension_numbers<[1], [0], [0], [1], [0, 0, 1, 1], [], []>} : vector<8x32xf32>, vector<32x32xf32>, vector<8x32xf32> -> vector<8x32xf32>
    %c0_15 = arith.constant 0 : index
    %c0_16 = arith.constant 0 : index
    %17 = vector.load %arg7[%c0_15, %c0_16] : memref<1x32xf32, #tpu.memory_space<vmem>>, vector<1x32xf32>
    %18 = vector.broadcast %17 : vector<1x32xf32> to vector<8x32xf32>
    %19 = arith.addf %16, %18 : vector<8x32xf32>
    %c0_17 = arith.constant 0 : index
    %c0_18 = arith.constant 0 : index
    %20 = vector.load %arg8[%c0_17, %c0_18] : memref<8x32xf32, #tpu.memory_space<vmem>>, vector<8x32xf32>
    tpu.vector_store %arg8[%c0_17, %c0_18], %19 {strides = array<i32>} : memref<8x32xf32, #tpu.memory_space<vmem>>, vector<8x32xf32>,
    return
  }
  func.func @transform_0(%arg0: i32) -> (i32, i32) {
    %c0_i32 = arith.constant 0 : i32
    %c0_i32_0 = arith.constant 0 : i32
    return %arg0, %c0_i32 : i32, i32
  }
  func.func @transform_1(%arg0: i32) -> (i32, i32) {
    %c0_i32 = arith.constant 0 : i32
    %c0_i32_0 = arith.constant 0 : i32
    %c0_i32_1 = arith.constant 0 : i32
    return %c0_i32, %c0_i32_0 : i32, i32
  }
  func.func @transform_2(%arg0: i32) -> (i32, i32) {
    %c0_i32 = arith.constant 0 : i32
    %c0_i32_0 = arith.constant 0 : i32
    %c0_i32_1 = arith.constant 0 : i32
    return %c0_i32, %c0_i32_0 : i32, i32
  }
  func.func @transform_3(%arg0: i32) -> (i32, i32) {
    %c0_i32 = arith.constant 0 : i32
    %c0_i32_0 = arith.constant 0 : i32
    %c0_i32_1 = arith.constant 0 : i32
    return %c0_i32, %c0_i32_0 : i32, i32
  }
  func.func @transform_4(%arg0: i32) -> (i32, i32) {
    %c0_i32 = arith.constant 0 : i32
    %c0_i32_0 = arith.constant 0 : i32
    %c0_i32_1 = arith.constant 0 : i32
    return %c0_i32, %c0_i32_0 : i32, i32
  }
  func.func @transform_5(%arg0: i32) -> (i32, i32) {
    %c0_i32 = arith.constant 0 : i32
    %c0_i32_0 = arith.constant 0 : i32
    %c0_i32_1 = arith.constant 0 : i32
    return %c0_i32, %c0_i32_0 : i32, i32
  }
  func.func @transform_6(%arg0: i32) -> (i32, i32) {
    %c0_i32 = arith.constant 0 : i32
    %c0_i32_0 = arith.constant 0 : i32
    %c0_i32_1 = arith.constant 0 : i32
    return %c0_i32, %c0_i32_0 : i32, i32
  }
  func.func @transform_7(%arg0: i32) -> (i32, i32) {
    %c0_i32 = arith.constant 0 : i32
    %c0_i32_0 = arith.constant 0 : i32
    return %arg0, %c0_i32 : i32, i32
  }
}

</mosaic_0001>

<llo_original>
// kernel: qrdqn_forward.1
$region0: #{qrdqn_forward.1}
  #allocation0 [shape = 'u32[]', space=smem, size = 0x4, offset = 0x4, fixed_abs, tag = 'smem constant byte address 0x4 - core index']
  #allocation1 [shape = 'u32[72,128]{1,0:T(1,128)}', space=vmem, size = 0x9000, scoped, tag = 'internal scratch']
  %s0 = inlined_call_operand.vmem [shape: f32[8,32], index: 0, kind: input, shape index: {}]
  %s1 = inlined_call_operand.hbm [shape: f32[32,32], index: 1, kind: input, shape index: {}]
  %s2 = inlined_call_operand.vmem [shape: f32[1,32], index: 2, kind: input, shape index: {}]
  %s3 = inlined_call_operand.hbm [shape: f32[32,32], index: 3, kind: input, shape index: {}]
  %s4 = inlined_call_operand.vmem [shape: f32[1,32], index: 4, kind: input, shape index: {}]
  %s5 = inlined_call_operand.hbm [shape: f32[32,32], index: 5, kind: input, shape index: {}]
  %s6 = inlined_call_operand.vmem [shape: f32[1,32], index: 6, kind: input, shape index: {}]
  %s7 = inlined_call_operand.vmem [shape: f32[8,32], index: 7, kind: output, shape index: {}]
  %s8 = sld [smem:[#allocation0]]
  $region50: #{qrdqn_forward.1} parent=0
    _
  %s10 = ssub.s32 1, %s8
  %s11 = scalar_select 0, %s10, %s8
  $region1: #{qrdqn_forward.1} parent=0
    #allocation2 [shape = 'u8[16384]{0}', space=vmem, size = 0x4000, scoped, tag = 'input window, operand 1, single buffered']
    #allocation3 [shape = 's32[1]{0}', space=sflag, size = 0x4, scoped, tag = 'scoped memory for qrdqn_forward.1']
    #allocation4 [shape = 'u8[16384]{0}', space=vmem, size = 0x4000, scoped, tag = 'input window, operand 3, single buffered']
    #allocation5 [shape = 's32[1]{0}', space=sflag, size = 0x4, scoped, tag = 'scoped memory for qrdqn_forward.1']
    #allocation6 [shape = 'u8[16384]{0}', space=vmem, size = 0x4000, scoped, tag = 'input window, operand 5, single buffered']
    %12 = vsyncpa [#allocation3], 0
    %13 = vsyncpa [#allocation5], 0
    // Predicated region
    $region2: #{qrdqn_forward.1} parent=1 // pred_check
      _
    $region3: #{qrdqn_forward.1} parent=1 // pred_check_branch
      %15 = sbr.rel (0) target = $region5
    $region4: #{qrdqn_forward.1} parent=1 // pred_region
      _
    $region5: #{qrdqn_forward.1} parent=1 // pred_fallthru
      _
    // Predicated region
    $region6: #{qrdqn_forward.1} parent=1 // pred_check
      _
    $region7: #{qrdqn_forward.1} parent=1 // pred_check_branch
      %17 = sbr.rel (0) target = $region9
    $region8: #{qrdqn_forward.1} parent=1 // pred_region
      %19 = vsyncadd [#allocation3], 0
      %s20 = sshll.u32 %s1, 4
      %s21 = int_to_ptr.hbm [resolvable:$true] %s20
      %s22 = sshll.u32 [#allocation2], 4
      %s23 = int_to_ptr.vmem [resolvable:$true] %s22
      %28 = dma.hbm_to_vmem [thread:$0]  %s21, 512, %s23, [#allocation3], 128, 128, 8
    $region9: #{qrdqn_forward.1} parent=1 // pred_fallthru
      _
    // Predicated region
    $region10: #{qrdqn_forward.1} parent=1 // pred_check
      _
    $region11: #{qrdqn_forward.1} parent=1 // pred_check_branch
      %30 = sbr.rel (0) target = $region13
    $region12: #{qrdqn_forward.1} parent=1 // pred_region
      _
    $region13: #{qrdqn_forward.1} parent=1 // pred_fallthru
      _
    // Predicated region
    $region14: #{qrdqn_forward.1} parent=1 // pred_check
      _
    $region15: #{qrdqn_forward.1} parent=1 // pred_check_branch
      %32 = sbr.rel (0) target = $region17
    $region16: #{qrdqn_forward.1} parent=1 // pred_region
      %34 = vsyncadd [#allocation5], 0
      %s35 = sshll.u32 %s3, 4
      %s36 = int_to_ptr.hbm [resolvable:$true] %s35
      %s37 = sshll.u32 [#allocation4], 4
      %s38 = int_to_ptr.vmem [resolvable:$true] %s37
      %43 = dma.hbm_to_vmem [thread:$0]  %s36, 512, %s38, [#allocation5], 128, 128, 8
    $region17: #{qrdqn_forward.1} parent=1 // pred_fallthru
      _
    // Predicated region
    $region18: #{qrdqn_forward.1} parent=1 // pred_check
      _
    $region19: #{qrdqn_forward.1} parent=1 // pred_check_branch
      %45 = sbr.rel (0) target = $region21
    $region20: #{qrdqn_forward.1} parent=1 // pred_region
      _
    $region21: #{qrdqn_forward.1} parent=1 // pred_fallthru
      _
    // Predicated region
    $region22: #{qrdqn_forward.1} parent=1 // pred_check
      _
    $region23: #{qrdqn_forward.1} parent=1 // pred_check_branch
      %47 = sbr.rel (0) target = $region25
    $region24: #{qrdqn_forward.1} parent=1 // pred_region
      %49 = vsyncadd [#allocation5], 0
      %s50 = sshll.u32 %s5, 4
      %s51 = int_to_ptr.hbm [resolvable:$true] %s50
      %s52 = sshll.u32 [#allocation6], 4
      %s53 = int_to_ptr.vmem [resolvable:$true] %s52
      %58 = dma.hbm_to_vmem [thread:$0]  %s51, 512, %s53, [#allocation5], 128, 128, 8
    $region25: #{qrdqn_forward.1} parent=1 // pred_fallthru
      _
    // Predicated region
    $region26: #{qrdqn_forward.1} parent=1 // pred_check
      _
    $region27: #{qrdqn_forward.1} parent=1 // pred_check_branch
      %60 = sbr.rel (0) target = $region29
    $region28: #{qrdqn_forward.1} parent=1 // pred_region
      _
    $region29: #{qrdqn_forward.1} parent=1 // pred_fallthru
      _
    // Predicated region
    $region30: #{qrdqn_forward.1} parent=1 // pred_check
      _
    $region31: #{qrdqn_forward.1} parent=1 // pred_check_branch
      %62 = sbr.rel (0) target = $region33
    $region32: #{qrdqn_forward.1} parent=1 // pred_region
      %64 = dma.done [#allocation3], 512
    $region33: #{qrdqn_forward.1} parent=1 // pred_fallthru
      _
    // Predicated region
    $region34: #{qrdqn_forward.1} parent=1 // pred_check
      _
    $region35: #{qrdqn_forward.1} parent=1 // pred_check_branch
      %66 = sbr.rel (0) target = $region37
    $region36: #{qrdqn_forward.1} parent=1 // pred_region
      %68 = dma.done [#allocation5], 512
    $region37: #{qrdqn_forward.1} parent=1 // pred_fallthru
      _
    // Predicated region
    $region38: #{qrdqn_forward.1} parent=1 // pred_check
      _
    $region39: #{qrdqn_forward.1} parent=1 // pred_check_branch
      %70 = sbr.rel (0) target = $region41
    $region40: #{qrdqn_forward.1} parent=1 // pred_region
      %72 = dma.done [#allocation5], 512
    $region41: #{qrdqn_forward.1} parent=1 // pred_fallthru
      _
    %v73 = vld [vmem:[%s0] sm:$0xff]
    %v74 = vld [vmem:[#allocation2] sm:$0xff]
    %v75 = vld [vmem:[#allocation2 + $0x8] sm:$0xff]
    %v76 = vld [vmem:[#allocation2 + $0x10] sm:$0xff]
    %v77 = vld [vmem:[#allocation2 + $0x18] sm:$0xff]
    %v78 = vld [vmem:[%s2] sm:$0x1]
    %v80 = vperm.slane %v78, 0
    %vm82 = vcmask 261120
    %v84 = vsel %vm82, %v73, 0
    %86 = vmatpush.msra.mxu0 0.0
    %87 = vmatpush.msra.mxu0 0.0
    %88 = vmatpush.msra.mxu0 0.0
    %89 = vmatpush.msra.mxu0 0.0
    %90 = vmatpush.msra.mxu0 0.0
    %91 = vmatpush.msra.mxu0 0.0
    %92 = vmatpush.msra.mxu0 0.0
    %93 = vmatpush.msra.mxu0 0.0
    %94 = vmatpush.msra.mxu0 0.0
    %95 = vmatpush.msra.mxu0 0.0
    %96 = vmatpush.msra.mxu0 0.0
    %97 = vmatpush.msra.mxu0 0.0
    %98 = vmatpush.msra.mxu0 %v77
    %99 = vmatpush.msra.mxu0 %v76
    %100 = vmatpush.msra.mxu0 %v75
    %101 = vmatpush.msra.mxu0 %v74
    %102 = vmatmul.f32.gmra.mxu0 %v84
    %v103 = vpop.f32.mrf.mxu0
    %v104 = vadd.f32 %v80, %v103
    %105 = vdwg.mxu0
    %v106 = vmax.f32 %v104, 0.0
    %v107 = vld [vmem:[#allocation4] sm:$0xff]
    %v108 = vld [vmem:[#allocation4 + $0x8] sm:$0xff]
    %v109 = vld [vmem:[#allocation4 + $0x10] sm:$0xff]
    %v110 = vld [vmem:[#allocation4 + $0x18] sm:$0xff]
    %v111 = vld [vmem:[%s4] sm:$0x1]
    %v113 = vperm.slane %v111, 0
    %v116 = vsel %vm82, %v106, 0
    %118 = vmatpush.msra.mxu0 0.0
    %119 = vmatpush.msra.mxu0 0.0
    %120 = vmatpush.msra.mxu0 0.0
    %121 = vmatpush.msra.mxu0 0.0
    %122 = vmatpush.msra.mxu0 0.0
    %123 = vmatpush.msra.mxu0 0.0
    %124 = vmatpush.msra.mxu0 0.0
    %125 = vmatpush.msra.mxu0 0.0
    %126 = vmatpush.msra.mxu0 0.0
    %127 = vmatpush.msra.mxu0 0.0
    %128 = vmatpush.msra.mxu0 0.0
    %129 = vmatpush.msra.mxu0 0.0
    %130 = vmatpush.msra.mxu0 %v110
    %131 = vmatpush.msra.mxu0 %v109
    %132 = vmatpush.msra.mxu0 %v108
    %133 = vmatpush.msra.mxu0 %v107
    %134 = vmatmul.f32.gmra.mxu0 %v116
    %v135 = vpop.f32.mrf.mxu0
    %v136 = vadd.f32 %v113, %v135
    %137 = vdwg.mxu0
    %v138 = vmax.f32 %v136, 0.0
    %v139 = vld [vmem:[#allocation6] sm:$0xff]
    %v140 = vld [vmem:[#allocation6 + $0x8] sm:$0xff]
    %v141 = vld [vmem:[#allocation6 + $0x10] sm:$0xff]
    %v142 = vld [vmem:[#allocation6 + $0x18] sm:$0xff]
    %v143 = vld [vmem:[%s6] sm:$0x1]
    %v145 = vperm.slane %v143, 0
    %v148 = vsel %vm82, %v138, 0
    %150 = vmatpush.msra.mxu0 0.0
    %151 = vmatpush.msra.mxu0 0.0
    %152 = vmatpush.msra.mxu0 0.0
    %153 = vmatpush.msra.mxu0 0.0
    %154 = vmatpush.msra.mxu0 0.0
    %155 = vmatpush.msra.mxu0 0.0
    %156 = vmatpush.msra.mxu0 0.0
    %157 = vmatpush.msra.mxu0 0.0
    %158 = vmatpush.msra.mxu0 0.0
    %159 = vmatpush.msra.mxu0 0.0
    %160 = vmatpush.msra.mxu0 0.0
    %161 = vmatpush.msra.mxu0 0.0
    %162 = vmatpush.msra.mxu0 %v142
    %163 = vmatpush.msra.mxu0 %v141
    %164 = vmatpush.msra.mxu0 %v140
    %165 = vmatpush.msra.mxu0 %v139
    %166 = vmatmul.f32.gmra.mxu0 %v148
    %v167 = vpop.f32.mrf.mxu0
    %v168 = vadd.f32 %v145, %v167
    %169 = vdwg.mxu0
    %170 = vst.msk [vmem:[%s7] sm:$0xff] %vm82, %v168
    // Predicated region
    $region42: #{qrdqn_forward.1} parent=1 // pred_check
      _
    $region43: #{qrdqn_forward.1} parent=1 // pred_check_branch
      %172 = sbr.rel (0) target = $region45
    $region44: #{qrdqn_forward.1} parent=1 // pred_region
      _
    $region45: #{qrdqn_forward.1} parent=1 // pred_fallthru
      _
    // Predicated region
    $region46: #{qrdqn_forward.1} parent=1 // pred_check
      _
    $region47: #{qrdqn_forward.1} parent=1 // pred_check_branch
      %174 = sbr.rel (0) target = $region49
    $region48: #{qrdqn_forward.1} parent=1 // pred_region
      _
    $region49: #{qrdqn_forward.1} parent=1 // pred_fallthru
      _
    %175 = vsyncpa [#allocation3], 1
    %176 = vsyncpa [#allocation5], 1

</llo_original>
